<compile_context>
chip_gen: v5e
topology: v5e:2x2
jax: 0.10.0
libtpu: 0.0.40
codegen_flags: <defaults>
</compile_context>

<pallas_src>
import functools

import jax
import jax.numpy as jnp
from jax.experimental import pallas as pl
from jax.experimental.pallas import tpu as pltpu


def mlp_kernel(x_ref, w1_ref, b1_ref, w2_ref, b2_ref,
               w3_ref, b3_ref, w4_ref, b4_ref, o_ref):
    # Feature-major / batch-on-lanes orientation:
    #   x_ref : (10, TB)         o_ref : (5, TB)
    #   w_l   : (out_l, in_l)    b_l   : (out_l, 1)
    # All four matmuls + ReLUs fused; weights (bf16) are VMEM-resident across
    # the whole batch grid, only the lane-dense x/out tiles stream per step.
    bf16 = jnp.bfloat16

    x = x_ref[...].astype(bf16)                                   # (10, TB)

    h = jnp.dot(w1_ref[...], x,
                preferred_element_type=jnp.float32) + b1_ref[...]  # (100, TB)
    h = jnp.maximum(h, 0.0)

    h = jnp.dot(w2_ref[...], h.astype(bf16),
                preferred_element_type=jnp.float32) + b2_ref[...]  # (50, TB)
    h = jnp.maximum(h, 0.0)

    h = jnp.dot(w3_ref[...], h.astype(bf16),
                preferred_element_type=jnp.float32) + b3_ref[...]  # (20, TB)
    h = jnp.maximum(h, 0.0)

    h = jnp.dot(w4_ref[...], h.astype(bf16),
                preferred_element_type=jnp.float32) + b4_ref[...]  # (5, TB)

    o_ref[...] = h.astype(o_ref.dtype)


@functools.partial(jax.jit, static_argnames=("tb",))
def complex_nn_forward_t(x_t, params, *, tb=8192):
    """Lane-dense core. x_t: (10, B) f32 -> (5, B) f32.

    params: dict of w1..w4 with shape (out, in) [PyTorch nn.Linear storage]
    and b1..b4 with shape (out, 1), all f32.

    tb: batch (lane) tile size per grid step; must be a multiple of 128 or
    >= B. Default 8192 amortizes per-step overhead while keeping the
    double-buffered tiles + (100, tb) f32 intermediates well under the 48 MiB
    VMEM budget below (safe on v7x's 64 MiB; sweep higher on v5e/v6e).
    """
    B = x_t.shape[1]
    tb = min(tb, B)   # whole-batch single block is always a legal block shape

    # Weights are cast to bf16 once here (MXU operands); biases stay f32 for
    # the f32 accumulator path.
    w1 = params["w1"].astype(jnp.bfloat16)
    w2 = params["w2"].astype(jnp.bfloat16)
    w3 = params["w3"].astype(jnp.bfloat16)
    w4 = params["w4"].astype(jnp.bfloat16)
    b1, b2, b3, b4 = params["b1"], params["b2"], params["b3"], params["b4"]

    # Resident operands: same block every grid step -> loaded into VMEM once.
    def resident(a):
        return pl.BlockSpec(a.shape, lambda i: (0,) * a.ndim)

    grid = (pl.cdiv(B, tb),)

    return pl.pallas_call(
        mlp_kernel,
        out_shape=jax.ShapeDtypeStruct((5, B), jnp.float32),
        grid=grid,
        in_specs=[
            pl.BlockSpec((10, tb), lambda i: (0, i)),   # x^T: streamed, lane-dense
            resident(w1), resident(b1),
            resident(w2), resident(b2),
            resident(w3), resident(b3),
            resident(w4), resident(b4),
        ],
        out_specs=pl.BlockSpec((5, tb), lambda i: (0, i)),  # lane-dense writeback
        compiler_params=pltpu.CompilerParams(
            # Shard the batch grid across TensorCores on v7x (no-op on 1-TC chips).
            dimension_semantics=("parallel",),
            # Right-sized: ~15-25 MiB actually needed at tb=8192; 48 MiB leaves
            # headroom below v7x's 64 MiB physical per-TC VMEM.
            vmem_limit_bytes=48 * 1024 * 1024,
        ),
    )(x_t, w1, b1, w2, b2, w3, b3, w4, b4)


@functools.partial(jax.jit, static_argnames=("tb",))
def complex_nn_forward(x, params, *, tb=8192):
    """PyTorch-compatible API: x (B, 10) f32 -> (B, 5) f32.

    Transposes around the lane-dense kernel. If the producer/consumer can work
    in (features, batch) layout directly, call complex_nn_forward_t instead to
    avoid these two extra XLA passes.
    """
    out_t = complex_nn_forward_t(x.T, params, tb=tb)   # (5, B)
    return out_t.T                                     # (B, 5)


def init_params(key):
    """Deterministic init mimicking PyTorch nn.Linear (U(-1/sqrt(fan_in), +)).

    Weights stored as (out, in) -- PyTorch's native layout -- biases as (out, 1).
    """
    dims = [(10, 100), (100, 50), (50, 20), (20, 5)]
    params = {}
    for i, (fan_in, fan_out) in enumerate(dims, start=1):
        key, kw, kb = jax.random.split(key, 3)
        bound = 1.0 / jnp.sqrt(jnp.float32(fan_in))
        params[f"w{i}"] = jax.random.uniform(
            kw, (fan_out, fan_in), jnp.float32, -bound, bound)
        params[f"b{i}"] = jax.random.uniform(
            kb, (fan_out, 1), jnp.float32, -bound, bound)
    return params


def reference_forward(x, params):
    """Reference in matching precision (bf16 MXU operands, f32 accumulate).

    Standard orientation: h = x @ W.T + b.T (PyTorch semantics).
    """
    h = x
    for i in range(1, 5):
        w = params[f"w{i}"].astype(jnp.bfloat16)
        h = jnp.dot(h.astype(jnp.bfloat16), w.T,
                    preferred_element_type=jnp.float32) + params[f"b{i}"].T
        if i < 4:
            h = jnp.maximum(h, 0.0)
    return h


if __name__ == "__main__":
    key = jax.random.PRNGKey(0)
    key, kx = jax.random.split(key)

    B = 256  # small test batch; tb=128 below exercises a 2-step pipelined grid
    x = jax.random.normal(kx, (B, 10), jnp.float32)
    params = init_params(key)

    out = complex_nn_forward(x, params, tb=128)
    out = jax.block_until_ready(out)

    ref = reference_forward(x, params)
    assert out.shape == (B, 5), out.shape
    # bf16 MXU operands -> compare against a matching-precision reference.
    assert jnp.allclose(out, ref, atol=1e-3, rtol=1e-3), "mismatch vs reference"

    print("KERNEL_OK")
</pallas_src>

<mosaic_0001>
module attributes {stable_mosaic.version = 11 : i64} {
  func.func @mlp_kernel(%arg0: i32, %arg1: memref<10x128xf32, #tpu.memory_space<vmem>>, %arg2: memref<100x10xbf16, #tpu.memory_space<vmem>>, %arg3: memref<100x1xf32, #tpu.memory_space<vmem>>, %arg4: memref<50x100xbf16, #tpu.memory_space<vmem>>, %arg5: memref<50x1xf32, #tpu.memory_space<vmem>>, %arg6: memref<20x50xbf16, #tpu.memory_space<vmem>>, %arg7: memref<20x1xf32, #tpu.memory_space<vmem>>, %arg8: memref<5x20xbf16, #tpu.memory_space<vmem>>, %arg9: memref<5x1xf32, #tpu.memory_space<vmem>>, %arg10: memref<5x128xf32, #tpu.memory_space<vmem>>) attributes {dimension_semantics = [#tpu.dimension_semantics<parallel>], iteration_bounds = array<i64: 2>, scalar_prefetch = 0 : i64, scratch_operands = 0 : i64, tpu.core_type = #tpu.core_type<tc>, window_params = [{transform_indices = @transform_0, window_bounds = array<i64: 10, 128>}, {pipeline_mode = #tpu.pipeline_mode<synchronous>, transform_indices = @transform_1, window_bounds = array<i64: 100, 10>}, {pipeline_mode = #tpu.pipeline_mode<synchronous>, transform_indices = @transform_2, window_bounds = array<i64: 100, 1>}, {pipeline_mode = #tpu.pipeline_mode<synchronous>, transform_indices = @transform_3, window_bounds = array<i64: 50, 100>}, {pipeline_mode = #tpu.pipeline_mode<synchronous>, transform_indices = @transform_4, window_bounds = array<i64: 50, 1>}, {pipeline_mode = #tpu.pipeline_mode<synchronous>, transform_indices = @transform_5, window_bounds = array<i64: 20, 50>}, {pipeline_mode = #tpu.pipeline_mode<synchronous>, transform_indices = @transform_6, window_bounds = array<i64: 20, 1>}, {pipeline_mode = #tpu.pipeline_mode<synchronous>, transform_indices = @transform_7, window_bounds = array<i64: 5, 20>}, {pipeline_mode = #tpu.pipeline_mode<synchronous>, transform_indices = @transform_8, window_bounds = array<i64: 5, 1>}, {transform_indices = @transform_9, window_bounds = array<i64: 5, 128>}]} {
    %c0 = arith.constant 0 : index
    %c0_0 = arith.constant 0 : index
    %0 = vector.load %arg1[%c0, %c0_0] : memref<10x128xf32, #tpu.memory_space<vmem>>, vector<10x128xf32>
    %1 = arith.truncf %0 : vector<10x128xf32> to vector<10x128xbf16>
    %c0_1 = arith.constant 0 : index
    %c0_2 = arith.constant 0 : index
    %2 = vector.load %arg2[%c0_1, %c0_2] : memref<100x10xbf16, #tpu.memory_space<vmem>>, vector<100x10xbf16>
    %cst = arith.constant dense<0.000000e+00> : vector<100x128xf32>
    %3 = tpu.matmul %2, %1, %cst {dimension_numbers = #tpu.dot_dimension_numbers<[1], [0], [0], [1], [0, 0, 1, 1], [], []>} : vector<100x10xbf16>, vector<10x128xbf16>, vector<100x128xf32> -> vector<100x128xf32>
    %c0_3 = arith.constant 0 : index
    %c0_4 = arith.constant 0 : index
    %4 = vector.load %arg3[%c0_3, %c0_4] : memref<100x1xf32, #tpu.memory_space<vmem>>, vector<100x1xf32>
    %5 = vector.broadcast %4 : vector<100x1xf32> to vector<100x128xf32>
    %6 = arith.addf %3, %5 : vector<100x128xf32>
    %cst_5 = arith.constant 0.000000e+00 : f32
    %7 = vector.broadcast %cst_5 : f32 to vector<100x128xf32>
    %8 = arith.maximumf %6, %7 : vector<100x128xf32>
    %c0_6 = arith.constant 0 : index
    %c0_7 = arith.constant 0 : index
    %9 = vector.load %arg4[%c0_6, %c0_7] : memref<50x100xbf16, #tpu.memory_space<vmem>>, vector<50x100xbf16>
    %10 = arith.truncf %8 : vector<100x128xf32> to vector<100x128xbf16>
    %cst_8 = arith.constant dense<0.000000e+00> : vector<50x128xf32>
    %11 = tpu.matmul %9, %10, %cst_8 {dimension_numbers = #tpu.dot_dimension_numbers<[1], [0], [0], [1], [0, 0, 1, 1], [], []>} : vector<50x100xbf16>, vector<100x128xbf16>, vector<50x128xf32> -> vector<50x128xf32>
    %c0_9 = arith.constant 0 : index
    %c0_10 = arith.constant 0 : index
    %12 = vector.load %arg5[%c0_9, %c0_10] : memref<50x1xf32, #tpu.memory_space<vmem>>, vector<50x1xf32>
    %13 = vector.broadcast %12 : vector<50x1xf32> to vector<50x128xf32>
    %14 = arith.addf %11, %13 : vector<50x128xf32>
    %cst_11 = arith.constant 0.000000e+00 : f32
    %15 = vector.broadcast %cst_11 : f32 to vector<50x128xf32>
    %16 = arith.maximumf %14, %15 : vector<50x128xf32>
    %c0_12 = arith.constant 0 : index
    %c0_13 = arith.constant 0 : index
    %17 = vector.load %arg6[%c0_12, %c0_13] : memref<20x50xbf16, #tpu.memory_space<vmem>>, vector<20x50xbf16>
    %18 = arith.truncf %16 : vector<50x128xf32> to vector<50x128xbf16>
    %cst_14 = arith.constant dense<0.000000e+00> : vector<20x128xf32>
    %19 = tpu.matmul %17, %18, %cst_14 {dimension_numbers = #tpu.dot_dimension_numbers<[1], [0], [0], [1], [0, 0, 1, 1], [], []>} : vector<20x50xbf16>, vector<50x128xbf16>, vector<20x128xf32> -> vector<20x128xf32>
    %c0_15 = arith.constant 0 : index
    %c0_16 = arith.constant 0 : index
    %20 = vector.load %arg7[%c0_15, %c0_16] : memref<20x1xf32, #tpu.memory_space<vmem>>, vector<20x1xf32>
    %21 = vector.broadcast %20 : vector<20x1xf32> to vector<20x128xf32>
    %22 = arith.addf %19, %21 : vector<20x128xf32>
    %cst_17 = arith.constant 0.000000e+00 : f32
    %23 = vector.broadcast %cst_17 : f32 to vector<20x128xf32>
    %24 = arith.maximumf %22, %23 : vector<20x128xf32>
    %c0_18 = arith.constant 0 : index
    %c0_19 = arith.constant 0 : index
    %25 = vector.load %arg8[%c0_18, %c0_19] : memref<5x20xbf16, #tpu.memory_space<vmem>>, vector<5x20xbf16>
    %26 = arith.truncf %24 : vector<20x128xf32> to vector<20x128xbf16>
    %cst_20 = arith.constant dense<0.000000e+00> : vector<5x128xf32>
    %27 = tpu.matmul %25, %26, %cst_20 {dimension_numbers = #tpu.dot_dimension_numbers<[1], [0], [0], [1], [0, 0, 1, 1], [], []>} : vector<5x20xbf16>, vector<20x128xbf16>, vector<5x128xf32> -> vector<5x128xf32>
    %c0_21 = arith.constant 0 : index
    %c0_22 = arith.constant 0 : index
    %28 = vector.load %arg9[%c0_21, %c0_22] : memref<5x1xf32, #tpu.memory_space<vmem>>, vector<5x1xf32>
    %29 = vector.broadcast %28 : vector<5x1xf32> to vector<5x128xf32>
    %30 = arith.addf %27, %29 : vector<5x128xf32>
    %c0_23 = arith.constant 0 : index
    %c0_24 = arith.constant 0 : index
    %31 = vector.load %arg10[%c0_23, %c0_24] : memref<5x128xf32, #tpu.memory_space<vmem>>, vector<5x128xf32>
    tpu.vector_store %arg10[%c0_23, %c0_24], %30 {strides = array<i32>} : memref<5x128xf32, #tpu.memory_space<vmem>>, vector<5x128xf32>,
    return
  }
  func.func @transform_0(%arg0: i32) -> (i32, i32) {
    %c0_i32 = arith.constant 0 : i32
    %c0_i32_0 = arith.constant 0 : i32
    return %c0_i32, %arg0 : i32, i32
  }
  func.func @transform_1(%arg0: i32) -> (i32, i32) {
    %c0_i32 = arith.constant 0 : i32
    %c0_i32_0 = arith.constant 0 : i32
    %c0_i32_1 = arith.constant 0 : i32
    return %c0_i32, %c0_i32_0 : i32, i32
  }
  func.func @transform_2(%arg0: i32) -> (i32, i32) {
    %c0_i32 = arith.constant 0 : i32
    %c0_i32_0 = arith.constant 0 : i32
    %c0_i32_1 = arith.constant 0 : i32
    return %c0_i32, %c0_i32_0 : i32, i32
  }
  func.func @transform_3(%arg0: i32) -> (i32, i32) {
    %c0_i32 = arith.constant 0 : i32
    %c0_i32_0 = arith.constant 0 : i32
    %c0_i32_1 = arith.constant 0 : i32
    return %c0_i32, %c0_i32_0 : i32, i32
  }
  func.func @transform_4(%arg0: i32) -> (i32, i32) {
    %c0_i32 = arith.constant 0 : i32
    %c0_i32_0 = arith.constant 0 : i32
    %c0_i32_1 = arith.constant 0 : i32
    return %c0_i32, %c0_i32_0 : i32, i32
  }
  func.func @transform_5(%arg0: i32) -> (i32, i32) {
    %c0_i32 = arith.constant 0 : i32
    %c0_i32_0 = arith.constant 0 : i32
    %c0_i32_1 = arith.constant 0 : i32
    return %c0_i32, %c0_i32_0 : i32, i32
  }
  func.func @transform_6(%arg0: i32) -> (i32, i32) {
    %c0_i32 = arith.constant 0 : i32
    %c0_i32_0 = arith.constant 0 : i32
    %c0_i32_1 = arith.constant 0 : i32
    return %c0_i32, %c0_i32_0 : i32, i32
  }
  func.func @transform_7(%arg0: i32) -> (i32, i32) {
    %c0_i32 = arith.constant 0 : i32
    %c0_i32_0 = arith.constant 0 : i32
    %c0_i32_1 = arith.constant 0 : i32
    return %c0_i32, %c0_i32_0 : i32, i32
  }
  func.func @transform_8(%arg0: i32) -> (i32, i32) {
    %c0_i32 = arith.constant 0 : i32
    %c0_i32_0 = arith.constant 0 : i32
    %c0_i32_1 = arith.constant 0 : i32
    return %c0_i32, %c0_i32_0 : i32, i32
  }
  func.func @transform_9(%arg0: i32) -> (i32, i32) {
    %c0_i32 = arith.constant 0 : i32
    %c0_i32_0 = arith.constant 0 : i32
    return %c0_i32, %arg0 : i32, i32
  }
}

</mosaic_0001>

<llo_original>
// kernel: complex_nn_forward_t.1
$region0: #{complex_nn_forward_t.1}
  #allocation0 [shape = 'u32[]', space=smem, size = 0x4, offset = 0x4, fixed_abs, tag = 'smem constant byte address 0x4 - core index']
  #allocation1 [shape = 'u32[72,128]{1,0:T(1,128)}', space=vmem, size = 0x9000, scoped, tag = 'internal scratch']
  %s0 = inlined_call_operand.vmem [shape: f32[10,256], index: 0, kind: input, shape index: {}]
  %s1 = inlined_call_operand.vmem [shape: bf16[100,10], index: 1, kind: input, shape index: {}]
  %s2 = inlined_call_operand.vmem [shape: f32[100,1], index: 2, kind: input, shape index: {}]
  %s3 = inlined_call_operand.vmem [shape: bf16[50,100], index: 3, kind: input, shape index: {}]
  %s4 = inlined_call_operand.vmem [shape: f32[50,1], index: 4, kind: input, shape index: {}]
  %s5 = inlined_call_operand.vmem [shape: bf16[20,50], index: 5, kind: input, shape index: {}]
  %s6 = inlined_call_operand.vmem [shape: f32[20,1], index: 6, kind: input, shape index: {}]
  %s7 = inlined_call_operand.vmem [shape: bf16[5,20], index: 7, kind: input, shape index: {}]
  %s8 = inlined_call_operand.vmem [shape: f32[5,1], index: 8, kind: input, shape index: {}]
  %s9 = inlined_call_operand.hbm [shape: f32[5,256], index: 9, kind: output, shape index: {}]
  %s10 = sld [smem:[#allocation0]]
  $region107: #{complex_nn_forward_t.1} parent=0
    _
  %s12 = ssub.s32 1, %s10
  %s13 = scalar_select 0, %s12, %s10
  $region1: #{complex_nn_forward_t.1} parent=0
    #allocation2 [shape = 'u8[16384]{0}', space=vmem, size = 0x4000, scoped, tag = 'input window, operand 0']
    #allocation3 [shape = 'u8[8192]{0}', space=vmem, size = 0x2000, scoped, tag = 'output window, operand 0']
    #allocation4 [shape = 's32[2]{0}', space=sflag, size = 0x8, scoped, tag = 'scoped memory for complex_nn_forward_t.1']
    %14 = vsyncpa [#allocation4], 0
    %s15 = scalar_lea.sflag [#allocation4], 1
    %16 = vsyncpa %s15, 0
    loop: start=0, step=1, limit=4
    $region2: #{complex_nn_forward_t.1} parent=1 // loop_pre_header
      _
    $region3: #{complex_nn_forward_t.1} parent=1 // loop_header
      %s18 = sphi 0, %s22
      %p19 = scmp.ge.s32.totalorder %s18, 4
      %s28 = sphi 0, %s30
      %s31 = sphi 0, %s28
      %s32 = sphi 0, %s31
      %s48 = sphi 0, %s32
      %s52 = sphi 0, %s52
      %s54 = sphi 0, %s52
      %s55 = sphi 0, %s54
      %s69 = sphi 0, %s55
      %s73 = sphi 0, %s73
      %s75 = sphi 0, %s73
      %s76 = sphi 0, %s75
      %s90 = sphi 0, %s76
      %s94 = sphi 0, %s94
      %s96 = sphi 0, %s94
      %s97 = sphi 0, %s96
      %s111 = sphi 0, %s97
      %s115 = sphi 0, %s115
      %s117 = sphi 0, %s115
      %s118 = sphi 0, %s117
      %s132 = sphi 0, %s118
      %s136 = sphi 0, %s136
      %s138 = sphi 0, %s136
      %s139 = sphi 0, %s138
      %s153 = sphi 0, %s139
      %s157 = sphi 0, %s157
      %s159 = sphi 0, %s157
      %s160 = sphi 0, %s159
      %s174 = sphi 0, %s160
      %s178 = sphi 0, %s178
      %s180 = sphi 0, %s178
      %s181 = sphi 0, %s180
      %s195 = sphi 0, %s181
      %s199 = sphi 0, %s199
      %s201 = sphi 0, %s199
      %s202 = sphi 0, %s201
      %s216 = sphi 0, %s202
      %s222 = sphi 0, %s224
      %s225 = sphi 0, %s222
      %s226 = sphi 0, %s225
      %s242 = sphi 0, %s226
    $region4: #{complex_nn_forward_t.1} parent=1 // loop_header_branch
      %21 = sbr.rel (%p19) target = $region8
    $region5: #{complex_nn_forward_t.1} parent=1 // loop_body
      %s23 = ssub.s32 %s18, 1
      %s24 = ssub.s32 %s18, 2
      %s25 = sadd.s32 %s18, 1
      %s26 = ssub.s32 %s18, %s25
      %p27 = scmp.eq.s32.totalorder %s26, 0
      %s29 = sadd.s32 %s28, 1
      %s30 = scalar_select %p27, %s28, %s29
      %p33 = pneg %p27
      %p34 = scmp.eq.s32.totalorder %s18, 1
      %p35 = por %p33, %p34
      %p36 = scmp.ne.s32.totalorder %s28, %s31
      %p37 = scmp.eq.s32.totalorder %s18, 0
      %p38 = por %p36, %p37
      %p39 = scmp.ne.s32.totalorder %s28, %s31
      %p40 = scmp.eq.s32.totalorder %s23, 1
      %p41 = por %p39, %p40
      %p42 = scmp.ne.s32.totalorder %s31, %s32
      %p43 = scmp.eq.s32.totalorder %s23, 0
      %p44 = por %p42, %p43
      %p45 = scmp.ne.s32.totalorder %s31, %s32
      %p46 = scmp.eq.s32.totalorder %s24, 1
      %p47 = por %p45, %p46
      %p49 = scmp.ne.s32.totalorder %s32, %s48
      %p50 = scmp.eq.s32.totalorder %s24, 0
      %p51 = por %p49, %p50
      %s53 = sadd.s32 %s52, 1
      %p56 = scmp.eq.s32.totalorder %s18, 1
      %p57 = scmp.ne.s32.totalorder %s52, %s54
      %p58 = scmp.eq.s32.totalorder %s18, 0
      %p59 = por %p57, %p58
      %p60 = scmp.ne.s32.totalorder %s52, %s54
      %p61 = scmp.eq.s32.totalorder %s23, 1
      %p62 = por %p60, %p61
      %p63 = scmp.ne.s32.totalorder %s54, %s55
      %p64 = scmp.eq.s32.totalorder %s23, 0
      %p65 = por %p63, %p64
      %p66 = scmp.ne.s32.totalorder %s54, %s55
      %p67 = scmp.eq.s32.totalorder %s24, 1
      %p68 = por %p66, %p67
      %p70 = scmp.ne.s32.totalorder %s55, %s69
      %p71 = scmp.eq.s32.totalorder %s24, 0
      %p72 = por %p70, %p71
      %s74 = sadd.s32 %s73, 1
      %p77 = scmp.eq.s32.totalorder %s18, 1
      %p78 = scmp.ne.s32.totalorder %s73, %s75
      %p79 = scmp.eq.s32.totalorder %s18, 0
      %p80 = por %p78, %p79
      %p81 = scmp.ne.s32.totalorder %s73, %s75
      %p82 = scmp.eq.s32.totalorder %s23, 1
      %p83 = por %p81, %p82
      %p84 = scmp.ne.s32.totalorder %s75, %s76
      %p85 = scmp.eq.s32.totalorder %s23, 0
      %p86 = por %p84, %p85
      %p87 = scmp.ne.s32.totalorder %s75, %s76
      %p88 = scmp.eq.s32.totalorder %s24, 1
      %p89 = por %p87, %p88
      %p91 = scmp.ne.s32.totalorder %s76, %s90
      %p92 = scmp.eq.s32.totalorder %s24, 0
      %p93 = por %p91, %p92
      %s95 = sadd.s32 %s94, 1
      %p98 = scmp.eq.s32.totalorder %s18, 1
      %p99 = scmp.ne.s32.totalorder %s94, %s96
      %p100 = scmp.eq.s32.totalorder %s18, 0
      %p101 = por %p99, %p100
      %p102 = scmp.ne.s32.totalorder %s94, %s96
      %p103 = scmp.eq.s32.totalorder %s23, 1
      %p104 = por %p102, %p103
      %p105 = scmp.ne.s32.totalorder %s96, %s97
      %p106 = scmp.eq.s32.totalorder %s23, 0
      %p107 = por %p105, %p106
      %p108 = scmp.ne.s32.totalorder %s96, %s97
      %p109 = scmp.eq.s32.totalorder %s24, 1
      %p110 = por %p108, %p109
      %p112 = scmp.ne.s32.totalorder %s97, %s111
      %p113 = scmp.eq.s32.totalorder %s24, 0
      %p114 = por %p112, %p113
      %s116 = sadd.s32 %s115, 1
      %p119 = scmp.eq.s32.totalorder %s18, 1
      %p120 = scmp.ne.s32.totalorder %s115, %s117
      %p121 = scmp.eq.s32.totalorder %s18, 0
      %p122 = por %p120, %p121
      %p123 = scmp.ne.s32.totalorder %s115, %s117
      %p124 = scmp.eq.s32.totalorder %s23, 1
      %p125 = por %p123, %p124
      %p126 = scmp.ne.s32.totalorder %s117, %s118
      %p127 = scmp.eq.s32.totalorder %s23, 0
      %p128 = por %p126, %p127
      %p129 = scmp.ne.s32.totalorder %s117, %s118
      %p130 = scmp.eq.s32.totalorder %s24, 1
      %p131 = por %p129, %p130
      %p133 = scmp.ne.s32.totalorder %s118, %s132
      %p134 = scmp.eq.s32.totalorder %s24, 0
      %p135 = por %p133, %p134
      %s137 = sadd.s32 %s136, 1
      %p140 = scmp.eq.s32.totalorder %s18, 1
      %p141 = scmp.ne.s32.totalorder %s136, %s138
      %p142 = scmp.eq.s32.totalorder %s18, 0
      %p143 = por %p141, %p142
      %p144 = scmp.ne.s32.totalorder %s136, %s138
      %p145 = scmp.eq.s32.totalorder %s23, 1
      %p146 = por %p144, %p145
      %p147 = scmp.ne.s32.totalorder %s138, %s139
      %p148 = scmp.eq.s32.totalorder %s23, 0
      %p149 = por %p147, %p148
      %p150 = scmp.ne.s32.totalorder %s138, %s139
      %p151 = scmp.eq.s32.totalorder %s24, 1
      %p152 = por %p150, %p151
      %p154 = scmp.ne.s32.totalorder %s139, %s153
      %p155 = scmp.eq.s32.totalorder %s24, 0
      %p156 = por %p154, %p155
      %s158 = sadd.s32 %s157, 1
      %p161 = scmp.eq.s32.totalorder %s18, 1
      %p162 = scmp.ne.s32.totalorder %s157, %s159
      %p163 = scmp.eq.s32.totalorder %s18, 0
      %p164 = por %p162, %p163
      %p165 = scmp.ne.s32.totalorder %s157, %s159
      %p166 = scmp.eq.s32.totalorder %s23, 1
      %p167 = por %p165, %p166
      %p168 = scmp.ne.s32.totalorder %s159, %s160
      %p169 = scmp.eq.s32.totalorder %s23, 0
      %p170 = por %p168, %p169
      %p171 = scmp.ne.s32.totalorder %s159, %s160
      %p172 = scmp.eq.s32.totalorder %s24, 1
      %p173 = por %p171, %p172
      %p175 = scmp.ne.s32.totalorder %s160, %s174
      %p176 = scmp.eq.s32.totalorder %s24, 0
      %p177 = por %p175, %p176
      %s179 = sadd.s32 %s178, 1
      %p182 = scmp.eq.s32.totalorder %s18, 1
      %p183 = scmp.ne.s32.totalorder %s178, %s180
      %p184 = scmp.eq.s32.totalorder %s18, 0
      %p185 = por %p183, %p184
      %p186 = scmp.ne.s32.totalorder %s178, %s180
      %p187 = scmp.eq.s32.totalorder %s23, 1
      %p188 = por %p186, %p187
      %p189 = scmp.ne.s32.totalorder %s180, %s181
      %p190 = scmp.eq.s32.totalorder %s23, 0
      %p191 = por %p189, %p190
      %p192 = scmp.ne.s32.totalorder %s180, %s181
      %p193 = scmp.eq.s32.totalorder %s24, 1
      %p194 = por %p192, %p193
      %p196 = scmp.ne.s32.totalorder %s181, %s195
      %p197 = scmp.eq.s32.totalorder %s24, 0
      %p198 = por %p196, %p197
      %s200 = sadd.s32 %s199, 1
      %p203 = scmp.eq.s32.totalorder %s18, 1
      %p204 = scmp.ne.s32.totalorder %s199, %s201
      %p205 = scmp.eq.s32.totalorder %s18, 0
      %p206 = por %p204, %p205
      %p207 = scmp.ne.s32.totalorder %s199, %s201
      %p208 = scmp.eq.s32.totalorder %s23, 1
      %p209 = por %p207, %p208
      %p210 = scmp.ne.s32.totalorder %s201, %s202
      %p211 = scmp.eq.s32.totalorder %s23, 0
      %p212 = por %p210, %p211
      %p213 = scmp.ne.s32.totalorder %s201, %s202
      %p214 = scmp.eq.s32.totalorder %s24, 1
      %p215 = por %p213, %p214
      %p217 = scmp.ne.s32.totalorder %s202, %s216
      %p218 = scmp.eq.s32.totalorder %s24, 0
      %p219 = por %p217, %p218
      %s220 = ssub.s32 %s18, %s25
      %p221 = scmp.eq.s32.totalorder %s220, 0
      %s223 = sadd.s32 %s222, 1
      %s224 = scalar_select %p221, %s222, %s223
      %p227 = pneg %p221
      %p228 = scmp.eq.s32.totalorder %s18, 1
      %p229 = por %p227, %p228
      %p230 = scmp.ne.s32.totalorder %s222, %s225
      %p231 = scmp.eq.s32.totalorder %s18, 0
      %p232 = por %p230, %p231
      %p233 = scmp.ne.s32.totalorder %s222, %s225
      %p234 = scmp.eq.s32.totalorder %s23, 1
      %p235 = por %p233, %p234
      %p236 = scmp.ne.s32.totalorder %s225, %s226
      %p237 = scmp.eq.s32.totalorder %s23, 0
      %p238 = por %p236, %p237
      %p239 = scmp.ne.s32.totalorder %s225, %s226
      %p240 = scmp.eq.s32.totalorder %s24, 1
      %p241 = por %p239, %p240
      %p243 = scmp.ne.s32.totalorder %s226, %s242
      %p244 = scmp.eq.s32.totalorder %s24, 0
      %p245 = por %p243, %p244
      %p246 = scmp.le.s32.totalorder 1, %s18
      %p247 = scmp.lt.s32.totalorder %s18, 3
      %p248 = pnand %p246, %p247
      %p249 = pneg %p248
      // Predicated region
      $region9: #{complex_nn_forward_t.1} parent=5 // pred_check
        _
      $region10: #{complex_nn_forward_t.1} parent=5 // pred_check_branch
        %251 = sbr.rel (%p248) target = $region12
      $region11: #{complex_nn_forward_t.1} parent=5 // pred_region
        %s252 = ssub.s32 %s18, 1
        // Predicated region
        $region13: #{complex_nn_forward_t.1} parent=11 // pred_check
          %p253 = pneg %p65
        $region14: #{complex_nn_forward_t.1} parent=11 // pred_check_branch
          %255 = sbr.rel (%p253) target = $region16
        $region15: #{complex_nn_forward_t.1} parent=11 // pred_region
          _
        $region16: #{complex_nn_forward_t.1} parent=11 // pred_fallthru
          _
        // Predicated region
        $region17: #{complex_nn_forward_t.1} parent=11 // pred_check
          %p256 = pneg %p86
        $region18: #{complex_nn_forward_t.1} parent=11 // pred_check_branch
          %258 = sbr.rel (%p256) target = $region20
        $region19: #{complex_nn_forward_t.1} parent=11 // pred_region
          _
        $region20: #{complex_nn_forward_t.1} parent=11 // pred_fallthru
          _
        // Predicated region
        $region21: #{complex_nn_forward_t.1} parent=11 // pred_check
          %p259 = pneg %p107
        $region22: #{complex_nn_forward_t.1} parent=11 // pred_check_branch
          %261 = sbr.rel (%p259) target = $region24
        $region23: #{complex_nn_forward_t.1} parent=11 // pred_region
          _
        $region24: #{complex_nn_forward_t.1} parent=11 // pred_fallthru
          _
        // Predicated region
        $region25: #{complex_nn_forward_t.1} parent=11 // pred_check
          %p262 = pneg %p128
        $region26: #{complex_nn_forward_t.1} parent=11 // pred_check_branch
          %264 = sbr.rel (%p262) target = $region28
        $region27: #{complex_nn_forward_t.1} parent=11 // pred_region
          _
        $region28: #{complex_nn_forward_t.1} parent=11 // pred_fallthru
          _
        // Predicated region
        $region29: #{complex_nn_forward_t.1} parent=11 // pred_check
          %p265 = pneg %p149
        $region30: #{complex_nn_forward_t.1} parent=11 // pred_check_branch
          %267 = sbr.rel (%p265) target = $region32
        $region31: #{complex_nn_forward_t.1} parent=11 // pred_region
          _
        $region32: #{complex_nn_forward_t.1} parent=11 // pred_fallthru
          _
        // Predicated region
        $region33: #{complex_nn_forward_t.1} parent=11 // pred_check
          %p268 = pneg %p170
        $region34: #{complex_nn_forward_t.1} parent=11 // pred_check_branch
          %270 = sbr.rel (%p268) target = $region36
        $region35: #{complex_nn_forward_t.1} parent=11 // pred_region
          _
        $region36: #{complex_nn_forward_t.1} parent=11 // pred_fallthru
          _
        // Predicated region
        $region37: #{complex_nn_forward_t.1} parent=11 // pred_check
          %p271 = pneg %p191
        $region38: #{complex_nn_forward_t.1} parent=11 // pred_check_branch
          %273 = sbr.rel (%p271) target = $region40
        $region39: #{complex_nn_forward_t.1} parent=11 // pred_region
          _
        $region40: #{complex_nn_forward_t.1} parent=11 // pred_fallthru
          _
        // Predicated region
        $region41: #{complex_nn_forward_t.1} parent=11 // pred_check
          %p274 = pneg %p212
        $region42: #{complex_nn_forward_t.1} parent=11 // pred_check_branch
          %276 = sbr.rel (%p274) target = $region44
        $region43: #{complex_nn_forward_t.1} parent=11 // pred_region
          _
        $region44: #{complex_nn_forward_t.1} parent=11 // pred_fallthru
          _
      $region12: #{complex_nn_forward_t.1} parent=5 // pred_fallthru
        _
      %p277 = scmp.lt.s32.totalorder %s18, 2
      // Predicated region
      $region45: #{complex_nn_forward_t.1} parent=5 // pred_check
        %p278 = pneg %p277
      $region46: #{complex_nn_forward_t.1} parent=5 // pred_check_branch
        %280 = sbr.rel (%p278) target = $region48
      $region47: #{complex_nn_forward_t.1} parent=5 // pred_region
        // Predicated region
        $region49: #{complex_nn_forward_t.1} parent=47 // pred_check
          %p281 = pneg %p38
        $region50: #{complex_nn_forward_t.1} parent=47 // pred_check_branch
          %283 = sbr.rel (%p281) target = $region52
        $region51: #{complex_nn_forward_t.1} parent=47 // pred_region
          %s284 = sand.u32 %s28, 1
          %s285 = sand.u32 %s28, 1
          %s286 = smul.addr %s285, 16
          %s287 = scalar_lea.vmem [#allocation2], %s286
          %s288 = smul.addr %s18, 8
          %s289 = scalar_lea.vmem %s0, %s288
          // Predicated region
          $region53: #{complex_nn_forward_t.1} parent=51 // pred_check
            _
          $region54: #{complex_nn_forward_t.1} parent=51 // pred_check_branch
            %291 = sbr.rel (0) target = $region56
          $region55: #{complex_nn_forward_t.1} parent=51 // pred_region
            // Predicated region
            $region57: #{complex_nn_forward_t.1} parent=55 // pred_check
              _
            $region58: #{complex_nn_forward_t.1} parent=55 // pred_check_branch
              %293 = sbr.rel (0) target = $region60
            $region59: #{complex_nn_forward_t.1} parent=55 // pred_region
              // Predicated region
              $region72: #{complex_nn_forward_t.1} parent=59 // pred_check
                _
              $region73: #{complex_nn_forward_t.1} parent=59 // pred_check_branch
                %311 = sbr.rel (0) target = $region75
              $region74: #{complex_nn_forward_t.1} parent=59 // pred_region
                loop: start=0, step=1, limit=1
                $region76: #{complex_nn_forward_t.1} parent=74 // loop_pre_header
                  _
                $region77: #{complex_nn_forward_t.1} parent=74 // loop_header
                  %s313 = sphi 0, %s317
                  %p314 = scmp.ge.s32.totalorder %s313, 1
                  %s318 = sphi %s289, %s289
                  %s319 = sphi %s287, %s287
                $region78: #{complex_nn_forward_t.1} parent=74 // loop_header_branch
                  %316 = sbr.rel (%p314) target = $region82
                $region79: #{complex_nn_forward_t.1} parent=74 // loop_body
                  %v320 = vld [vmem:[%s318] sm:$0xff]
                  %321 = vst [vmem:[%s319] sm:$0xff] %v320
                  %v322 = vld [vmem:[%s318 + $0x10] sm:$0xff]
                  %323 = vst [vmem:[%s319 + $0x8] sm:$0xff] %v322
                $region80: #{complex_nn_forward_t.1} parent=74 // loop_footer
                  %s317 = sadd.s32 1, %s313
                $region81: #{complex_nn_forward_t.1} parent=74 // loop_footer_branch
                  %312 = sbr.rel target = $region77
                $region82: #{complex_nn_forward_t.1} parent=74 // loop_exit
                  _
              $region75: #{complex_nn_forward_t.1} parent=59 // pred_fallthru
                _
              // Predicated region
              $region83: #{complex_nn_forward_t.1} parent=59 // pred_check
                _
              $region84: #{complex_nn_forward_t.1} parent=59 // pred_check_branch
                %325 = sbr.rel target = $region86
              $region85: #{complex_nn_forward_t.1} parent=59 // pred_region
                _
              $region86: #{complex_nn_forward_t.1} parent=59 // pred_fallthru
                _
            $region60: #{complex_nn_forward_t.1} parent=55 // pred_fallthru
              _
            // Predicated region
            $region61: #{complex_nn_forward_t.1} parent=55 // pred_check
              _
            $region62: #{complex_nn_forward_t.1} parent=55 // pred_check_branch
              %295 = sbr.rel target = $region64
            $region63: #{complex_nn_forward_t.1} parent=55 // pred_region
              %s297 = ssub.s32 256, 1
              loop: start=0, step=1, limit=1
              $region65: #{complex_nn_forward_t.1} parent=63 // loop_pre_header
                _
              $region66: #{complex_nn_forward_t.1} parent=63 // loop_header
                %s299 = sphi 0, %s303
                %p300 = scmp.ge.s32.totalorder %s299, 1
                %s304 = sphi %s289, %s289
                %s305 = sphi %s287, %s287
              $region67: #{complex_nn_forward_t.1} parent=63 // loop_header_branch
                %302 = sbr.rel (%p300) target = $region71
              $region68: #{complex_nn_forward_t.1} parent=63 // loop_body
                %v306 = vld [vmem:[%s304] sm:%s297]
                %307 = vst [vmem:[%s305] sm:%s297] %v306
                %v308 = vld [vmem:[%s304 + $0x10] sm:%s297]
                %309 = vst [vmem:[%s305 + $0x8] sm:%s297] %v308
              $region69: #{complex_nn_forward_t.1} parent=63 // loop_footer
                %s303 = sadd.s32 1, %s299
              $region70: #{complex_nn_forward_t.1} parent=63 // loop_footer_branch
                %298 = sbr.rel target = $region66
              $region71: #{complex_nn_forward_t.1} parent=63 // loop_exit
                _
            $region64: #{complex_nn_forward_t.1} parent=55 // pred_fallthru
              _
          $region56: #{complex_nn_forward_t.1} parent=51 // pred_fallthru
            _
          %326 = vnop
        $region52: #{complex_nn_forward_t.1} parent=47 // pred_fallthru
          _
      $region48: #{complex_nn_forward_t.1} parent=5 // pred_fallthru
        _
      %p327 = scmp.le.s32.totalorder 1, %s18
      %p328 = scmp.lt.s32.totalorder %s18, 3
      %p329 = pnand %p327, %p328
      %p330 = pneg %p329
      // Predicated region
      $region87: #{complex_nn_forward_t.1} parent=5 // pred_check
        _
      $region88: #{complex_nn_forward_t.1} parent=5 // pred_check_branch
        %332 = sbr.rel (%p329) target = $region90
      $region89: #{complex_nn_forward_t.1} parent=5 // pred_region
        %s333 = ssub.s32 %s18, 1
        %s334 = sand.u32 %s31, 1
        %s335 = sand.u32 %s31, 1
        %s336 = smul.addr %s335, 16
        %s337 = scalar_lea.vmem [#allocation2], %s336
        // Predicated region
        $region91: #{complex_nn_forward_t.1} parent=89 // pred_check
          %p338 = pneg %p44
        $region92: #{complex_nn_forward_t.1} parent=89 // pred_check_branch
          %340 = sbr.rel (%p338) target = $region94
        $region93: #{complex_nn_forward_t.1} parent=89 // pred_region
          _
        $region94: #{complex_nn_forward_t.1} parent=89 // pred_fallthru
          _
        %s341 = sand.u32 %s31, 1
        %s342 = sand.u32 %s31, 1
        %s343 = smul.addr %s342, 16
        %s344 = scalar_lea.vmem [#allocation2], %s343
        %p345 = pneg %p44
        %p346 = pneg %p41
        %p347 = pneg %p65
        %p348 = pneg %p62
        %p349 = pneg %p86
        %p350 = pneg %p83
        %p351 = pneg %p107
        %p352 = pneg %p104
        %p353 = pneg %p128
        %p354 = pneg %p125
        %p355 = pneg %p149
        %p356 = pneg %p146
        %p357 = pneg %p170
        %p358 = pneg %p167
        %p359 = pneg %p191
        %p360 = pneg %p188
        %p361 = pneg %p212
        %p362 = pneg %p209
        %p363 = pneg %p238
        %p364 = pneg %p235
        %s365 = sand.u32 %s225, 1
        %s366 = scalar_lea.sflag [#allocation4], %s365
        %s367 = sand.u32 %s225, 1
        %s368 = smul.addr %s367, 8
        %s369 = scalar_lea.vmem [#allocation3], %s368
        %v371 = vld [vmem:[%s337] sm:$0xff]
        %v372 = vld [vmem:[%s337 + $0x8] sm:$0x3]
        %v373 = vpack.c.bf16 %v372, %v371
        %v374 = vld [vmem:[%s1] sm:$0xf]
        %v375 = vld [vmem:[%s1 + $0x4] sm:$0xf]
        %v376 = vld [vmem:[%s1 + $0x8] sm:$0xf]
        %v377 = vld [vmem:[%s1 + $0xc] sm:$0xf]
        %v378 = vld [vmem:[%s1 + $0x10] sm:$0xf]
        %v379 = vld [vmem:[%s1 + $0x14] sm:$0xf]
        %v380 = vld [vmem:[%s1 + $0x18] sm:$0xf]
        %v381 = vld [vmem:[%s1 + $0x1c] sm:$0xf]
        %v382 = vld [vmem:[%s1 + $0x20] sm:$0xf]
        %v383 = vld [vmem:[%s1 + $0x24] sm:$0xf]
        %v384 = vld [vmem:[%s1 + $0x28] sm:$0xf]
        %v385 = vld [vmem:[%s1 + $0x2c] sm:$0xf]
        %v386 = vld [vmem:[%s1 + $0x30] sm:$0x3]
        %v387 = vld [vmem:[%s2] sm:$0xff]
        %v388 = vld [vmem:[%s2 + $0x8] sm:$0xff]
        %v389 = vld [vmem:[%s2 + $0x10] sm:$0xff]
        %v390 = vld [vmem:[%s2 + $0x18] sm:$0xff]
        %v391 = vld [vmem:[%s2 + $0x20] sm:$0xff]
        %v392 = vld [vmem:[%s2 + $0x28] sm:$0xff]
        %v393 = vld [vmem:[%s2 + $0x30] sm:$0xff]
        %v394 = vld [vmem:[%s2 + $0x38] sm:$0xff]
        %v395 = vld [vmem:[%s2 + $0x40] sm:$0xff]
        %v396 = vld [vmem:[%s2 + $0x48] sm:$0xff]
        %v397 = vld [vmem:[%s2 + $0x50] sm:$0xff]
        %v398 = vld [vmem:[%s2 + $0x58] sm:$0xff]
        %v399 = vld [vmem:[%s2 + $0x60] sm:$0xf]
        %401 = vset.pattern.permute.xlu0 0
        %402 = vperm.xlu0 %401, %v387
        %v403 = vpop.permute.xlu0 %402
        %406 = vset.pattern.permute.xlu0 0
        %407 = vperm.xlu0 %406, %v388
        %v408 = vpop.permute.xlu0 %407
        %411 = vset.pattern.permute.xlu0 0
        %412 = vperm.xlu0 %411, %v389
        %v413 = vpop.permute.xlu0 %412
        %416 = vset.pattern.permute.xlu0 0
        %417 = vperm.xlu0 %416, %v390
        %v418 = vpop.permute.xlu0 %417
        %421 = vset.pattern.permute.xlu0 0
        %422 = vperm.xlu0 %421, %v391
        %v423 = vpop.permute.xlu0 %422
        %426 = vset.pattern.permute.xlu0 0
        %427 = vperm.xlu0 %426, %v392
        %v428 = vpop.permute.xlu0 %427
        %431 = vset.pattern.permute.xlu0 0
        %432 = vperm.xlu0 %431, %v393
        %v433 = vpop.permute.xlu0 %432
        %436 = vset.pattern.permute.xlu0 0
        %437 = vperm.xlu0 %436, %v394
        %v438 = vpop.permute.xlu0 %437
        %441 = vset.pattern.permute.xlu0 0
        %442 = vperm.xlu0 %441, %v395
        %v443 = vpop.permute.xlu0 %442
        %446 = vset.pattern.permute.xlu0 0
        %447 = vperm.xlu0 %446, %v396
        %v448 = vpop.permute.xlu0 %447
        %451 = vset.pattern.permute.xlu0 0
        %452 = vperm.xlu0 %451, %v397
        %v453 = vpop.permute.xlu0 %452
        %456 = vset.pattern.permute.xlu0 0
        %457 = vperm.xlu0 %456, %v398
        %v458 = vpop.permute.xlu0 %457
        %461 = vset.pattern.permute.xlu0 0
        %462 = vperm.xlu0 %461, %v399
        %v463 = vpop.permute.xlu0 %462
        %v478 = vunpack.c.l.b16 %v374
        %v479 = vunpack.c.l.b16 %v375
        %v480 = vunpack.c.l.b16 %v376
        %v481 = vunpack.c.l.b16 %v377
        %v482 = vunpack.c.l.b16 %v378
        %v483 = vunpack.c.l.b16 %v379
        %v484 = vunpack.c.l.b16 %v380
        %v485 = vunpack.c.l.b16 %v381
        %v486 = vunpack.c.l.b16 %v382
        %v487 = vunpack.c.l.b16 %v383
        %v488 = vunpack.c.l.b16 %v384
        %v489 = vunpack.c.l.b16 %v385
        %v490 = vunpack.c.l.b16 %v386
        %v491 = vpack.c.b16 %v479, %v478
        %v492 = vpack.c.b16 %v481, %v480
        %v493 = vpack.c.b16 %v483, %v482
        %v494 = vpack.c.b16 %v485, %v484
        %v495 = vpack.c.b16 %v487, %v486
        %v496 = vpack.c.b16 %v489, %v488
        %v497 = vpack.c.b16 %v490, %v490
        %vm498 = vcmask 80896
        %v500 = vsel %vm498, %v491, 0
        %v503 = vsel %vm498, %v492, 0
        %v506 = vsel %vm498, %v493, 0
        %v509 = vsel %vm498, %v494, 0
        %v512 = vsel %vm498, %v495, 0
        %v515 = vsel %vm498, %v496, 0
        %v518 = vsel %vm498, %v497, 0
        %vm520 = vcmask 1044480
        %v522 = vsel %vm520, %v373, 0
        %524 = vmatpush.bf16.msra.mxu0 0
        %525 = vmatpush.bf16.msra.mxu0 0
        %526 = vmatpush.bf16.msra.mxu0 0
        %527 = vmatpush.bf16.msra.mxu0 0
        %528 = vmatpush.bf16.msra.mxu0 0
        %529 = vmatpush.bf16.msra.mxu0 0
        %530 = vmatpush.bf16.msra.mxu0 0
        %531 = vmatpush.bf16.msra.mxu0 %v522
        %532 = vmatmul.bf16.gmra.mxu0 %v500
        %v533 = vpop.f32.mrf.mxu0
        %v534 = vadd.f32 %v403, %v533
        %v535 = vpop.f32.mrf.mxu0
        %v536 = vadd.f32 %v408, %v535
        %537 = vmatmul.bf16.gmra.mxu0 %v503
        %v538 = vpop.f32.mrf.mxu0
        %v539 = vadd.f32 %v413, %v538
        %v540 = vpop.f32.mrf.mxu0
        %v541 = vadd.f32 %v418, %v540
        %542 = vmatmul.bf16.gmra.mxu0 %v506
        %v543 = vpop.f32.mrf.mxu0
        %v544 = vadd.f32 %v423, %v543
        %v545 = vpop.f32.mrf.mxu0
        %v546 = vadd.f32 %v428, %v545
        %547 = vmatmul.bf16.gmra.mxu0 %v509
        %v548 = vpop.f32.mrf.mxu0
        %v549 = vadd.f32 %v433, %v548
        %v550 = vpop.f32.mrf.mxu0
        %v551 = vadd.f32 %v438, %v550
        %552 = vmatmul.bf16.gmra.mxu0 %v512
        %v553 = vpop.f32.mrf.mxu0
        %v554 = vadd.f32 %v443, %v553
        %v555 = vpop.f32.mrf.mxu0
        %v556 = vadd.f32 %v448, %v555
        %557 = vmatmul.bf16.gmra.mxu0 %v515
        %v558 = vpop.f32.mrf.mxu0
        %v559 = vadd.f32 %v453, %v558
        %v560 = vpop.f32.mrf.mxu0
        %v561 = vadd.f32 %v458, %v560
        %562 = vmatmul.bf16.gmra.mxu0 %v518
        %v563 = vpop.f32.mrf.mxu0
        %v564 = vadd.f32 %v463, %v563
        %v565 = vpop.f32.mrf.mxu0
        %566 = vdwg.mxu0
        %v567 = vmax.f32 %v534, 0.0
        %v568 = vmax.f32 %v536, 0.0
        %v569 = vmax.f32 %v539, 0.0
        %v570 = vmax.f32 %v541, 0.0
        %v571 = vmax.f32 %v544, 0.0
        %v572 = vmax.f32 %v546, 0.0
        %v573 = vmax.f32 %v549, 0.0
        %v574 = vmax.f32 %v551, 0.0
        %v575 = vmax.f32 %v554, 0.0
        %v576 = vmax.f32 %v556, 0.0
        %v577 = vmax.f32 %v559, 0.0
        %v578 = vmax.f32 %v561, 0.0
        %v579 = vmax.f32 %v564, 0.0
        %v580 = vld [vmem:[%s3] sm:$0xf]
        %v581 = vld [vmem:[%s3 + $0x4] sm:$0xf]
        %v582 = vld [vmem:[%s3 + $0x8] sm:$0xf]
        %v583 = vld [vmem:[%s3 + $0xc] sm:$0xf]
        %v584 = vld [vmem:[%s3 + $0x10] sm:$0xf]
        %v585 = vld [vmem:[%s3 + $0x14] sm:$0xf]
        %v586 = vld [vmem:[%s3 + $0x18] sm:$0x1]
        %v587 = vpack.c.bf16 %v568, %v567
        %v588 = vpack.c.bf16 %v570, %v569
        %v589 = vpack.c.bf16 %v572, %v571
        %v590 = vpack.c.bf16 %v574, %v573
        %v591 = vpack.c.bf16 %v576, %v575
        %v592 = vpack.c.bf16 %v578, %v577
        %v593 = vpack.c.bf16 %v579, %v579
        %v594 = vld [vmem:[%s4] sm:$0xff]
        %v595 = vld [vmem:[%s4 + $0x8] sm:$0xff]
        %v596 = vld [vmem:[%s4 + $0x10] sm:$0xff]
        %v597 = vld [vmem:[%s4 + $0x18] sm:$0xff]
        %v598 = vld [vmem:[%s4 + $0x20] sm:$0xff]
        %v599 = vld [vmem:[%s4 + $0x28] sm:$0xff]
        %v600 = vld [vmem:[%s4 + $0x30] sm:$0x3]
        %602 = vset.pattern.permute.xlu0 0
        %603 = vperm.xlu0 %602, %v594
        %v604 = vpop.permute.xlu0 %603
        %607 = vset.pattern.permute.xlu0 0
        %608 = vperm.xlu0 %607, %v595
        %v609 = vpop.permute.xlu0 %608
        %612 = vset.pattern.permute.xlu0 0
        %613 = vperm.xlu0 %612, %v596
        %v614 = vpop.permute.xlu0 %613
        %617 = vset.pattern.permute.xlu0 0
        %618 = vperm.xlu0 %617, %v597
        %v619 = vpop.permute.xlu0 %618
        %622 = vset.pattern.permute.xlu0 0
        %623 = vperm.xlu0 %622, %v598
        %v624 = vpop.permute.xlu0 %623
        %627 = vset.pattern.permute.xlu0 0
        %628 = vperm.xlu0 %627, %v599
        %v629 = vpop.permute.xlu0 %628
        %632 = vset.pattern.permute.xlu0 0
        %633 = vperm.xlu0 %632, %v600
        %v634 = vpop.permute.xlu0 %633
        %v643 = vunpack.c.l.b16 %v580
        %v644 = vunpack.c.l.b16 %v581
        %v645 = vunpack.c.l.b16 %v582
        %v646 = vunpack.c.l.b16 %v583
        %v647 = vunpack.c.l.b16 %v584
        %v648 = vunpack.c.l.b16 %v585
        %v649 = vunpack.c.l.b16 %v586
        %v650 = vpack.c.b16 %v644, %v643
        %v651 = vpack.c.b16 %v646, %v645
        %v652 = vpack.c.b16 %v648, %v647
        %v653 = vpack.c.b16 %v649, %v649
        %vm654 = vcmask 818176
        %v656 = vsel %vm654, %v650, 0
        %v659 = vsel %vm654, %v651, 0
        %v662 = vsel %vm654, %v652, 0
        %v665 = vsel %vm654, %v653, 0
        %vm667 = vcmask 1041408
        %v669 = vsel %vm667, %v593, 0
        %671 = vmatpush.bf16.msra.mxu0 0
        %672 = vmatpush.bf16.msra.mxu0 %v669
        %673 = vmatpush.bf16.msra.mxu0 %v592
        %674 = vmatpush.bf16.msra.mxu0 %v591
        %675 = vmatpush.bf16.msra.mxu0 %v590
        %676 = vmatpush.bf16.msra.mxu0 %v589
        %677 = vmatpush.bf16.msra.mxu0 %v588
        %678 = vmatpush.bf16.msra.mxu0 %v587
        %679 = vmatmul.bf16.gmra.mxu0 %v656
        %v680 = vpop.f32.mrf.mxu0
        %v681 = vadd.f32 %v604, %v680
        %v682 = vpop.f32.mrf.mxu0
        %v683 = vadd.f32 %v609, %v682
        %684 = vmatmul.bf16.gmra.mxu0 %v659
        %v685 = vpop.f32.mrf.mxu0
        %v686 = vadd.f32 %v614, %v685
        %v687 = vpop.f32.mrf.mxu0
        %v688 = vadd.f32 %v619, %v687
        %689 = vmatmul.bf16.gmra.mxu0 %v662
        %v690 = vpop.f32.mrf.mxu0
        %v691 = vadd.f32 %v624, %v690
        %v692 = vpop.f32.mrf.mxu0
        %v693 = vadd.f32 %v629, %v692
        %694 = vmatmul.bf16.gmra.mxu0 %v665
        %v695 = vpop.f32.mrf.mxu0
        %v696 = vadd.f32 %v634, %v695
        %v697 = vpop.f32.mrf.mxu0
        %698 = vdwg.mxu0
        %v699 = vmax.f32 %v681, 0.0
        %v700 = vmax.f32 %v683, 0.0
        %v701 = vmax.f32 %v686, 0.0
        %v702 = vmax.f32 %v688, 0.0
        %v703 = vmax.f32 %v691, 0.0
        %v704 = vmax.f32 %v693, 0.0
        %v705 = vmax.f32 %v696, 0.0
        %v706 = vld [vmem:[%s5] sm:$0xf]
        %v707 = vld [vmem:[%s5 + $0x4] sm:$0xf]
        %v708 = vld [vmem:[%s5 + $0x8] sm:$0x3]
        %v709 = vpack.c.bf16 %v700, %v699
        %v710 = vpack.c.bf16 %v702, %v701
        %v711 = vpack.c.bf16 %v704, %v703
        %v712 = vpack.c.bf16 %v705, %v705
        %v713 = vld [vmem:[%s6] sm:$0xff]
        %v714 = vld [vmem:[%s6 + $0x8] sm:$0xff]
        %v715 = vld [vmem:[%s6 + $0x10] sm:$0xf]
        %717 = vset.pattern.permute.xlu0 0
        %718 = vperm.xlu0 %717, %v713
        %v719 = vpop.permute.xlu0 %718
        %722 = vset.pattern.permute.xlu0 0
        %723 = vperm.xlu0 %722, %v714
        %v724 = vpop.permute.xlu0 %723
        %727 = vset.pattern.permute.xlu0 0
        %728 = vperm.xlu0 %727, %v715
        %v729 = vpop.permute.xlu0 %728
        %v734 = vunpack.c.l.b16 %v706
        %v735 = vunpack.c.l.b16 %v707
        %v736 = vunpack.c.l.b16 %v708
        %v737 = vpack.c.b16 %v735, %v734
        %v738 = vpack.c.b16 %v736, %v736
        %vm739 = vcmask 408576
        %v741 = vsel %vm739, %v737, 0
        %v744 = vsel %vm739, %v738, 0
        %vm746 = vcmask 1040384
        %v748 = vsel %vm746, %v712, 0
        %750 = vmatpush.bf16.msra.mxu0 0
        %751 = vmatpush.bf16.msra.mxu0 0
        %752 = vmatpush.bf16.msra.mxu0 0
        %753 = vmatpush.bf16.msra.mxu0 0
        %754 = vmatpush.bf16.msra.mxu0 %v748
        %755 = vmatpush.bf16.msra.mxu0 %v711
        %756 = vmatpush.bf16.msra.mxu0 %v710
        %757 = vmatpush.bf16.msra.mxu0 %v709
        %758 = vmatmul.bf16.gmra.mxu0 %v741
        %v759 = vpop.f32.mrf.mxu0
        %v760 = vadd.f32 %v719, %v759
        %v761 = vpop.f32.mrf.mxu0
        %v762 = vadd.f32 %v724, %v761
        %763 = vmatmul.bf16.gmra.mxu0 %v744
        %v764 = vpop.f32.mrf.mxu0
        %v765 = vadd.f32 %v729, %v764
        %v766 = vpop.f32.mrf.mxu0
        %767 = vdwg.mxu0
        %v768 = vmax.f32 %v760, 0.0
        %v769 = vmax.f32 %v762, 0.0
        %v770 = vmax.f32 %v765, 0.0
        %v771 = vld [vmem:[%s7] sm:$0x7]
        %v772 = vpack.c.bf16 %v769, %v768
        %v773 = vpack.c.bf16 %v770, %v770
        %v774 = vld [vmem:[%s8] sm:$0x1f]
        %776 = vset.pattern.permute.xlu0 0
        %777 = vperm.xlu0 %776, %v774
        %v778 = vpop.permute.xlu0 %777
        %vm780 = vcmask 162816
        %v782 = vsel %vm780, %v771, 0
        %v785 = vsel %vm667, %v773, 0
        %787 = vmatpush.bf16.msra.mxu0 0
        %788 = vmatpush.bf16.msra.mxu0 0
        %789 = vmatpush.bf16.msra.mxu0 0
        %790 = vmatpush.bf16.msra.mxu0 0
        %791 = vmatpush.bf16.msra.mxu0 0
        %792 = vmatpush.bf16.msra.mxu0 0
        %793 = vmatpush.bf16.msra.mxu0 %v785
        %794 = vmatpush.bf16.msra.mxu0 %v772
        %795 = vmatmul.bf16.gmra.mxu0 %v782
        %v796 = vpop.f32.mrf.mxu0
        %v797 = vadd.f32 %v778, %v796
        %v798 = vpop.f32.mrf.mxu0
        %799 = vdwg.mxu0
        %800 = vst [vmem:[%s369] sm:$0x1f] %v797
        %s801 = sand.u32 %s225, 1
        %s802 = scalar_lea.sflag [#allocation4], %s801
        %s803 = sand.u32 %s225, 1
        %s804 = smul.addr %s803, 8
        %s805 = scalar_lea.vmem [#allocation3], %s804
        // Predicated region
        $region95: #{complex_nn_forward_t.1} parent=89 // pred_check
          %p806 = pneg %p235
        $region96: #{complex_nn_forward_t.1} parent=89 // pred_check_branch
          %808 = sbr.rel (%p806) target = $region98
        $region97: #{complex_nn_forward_t.1} parent=89 // pred_region
          %810 = vsyncadd %s802, 0
          %s811 = smul.addr %s23, 8
          %s812 = scalar_lea.hbm %s9, %s811
          %s814 = sshll.u32 %s805, 4
          %s815 = int_to_ptr.vmem [resolvable:$true] %s814
          %s816 = sshll.u32 %s812, 4
          %s817 = int_to_ptr.hbm [resolvable:$true] %s816
          %819 = dma.vmem_to_hbm [thread:$0]  %s815, 128, %s817, %s802
        $region98: #{complex_nn_forward_t.1} parent=89 // pred_fallthru
          _
      $region90: #{complex_nn_forward_t.1} parent=5 // pred_fallthru
        _
      %p820 = scmp.le.s32.totalorder 2, %s18
      // Predicated region
      $region99: #{complex_nn_forward_t.1} parent=5 // pred_check
        %p821 = pneg %p820
      $region100: #{complex_nn_forward_t.1} parent=5 // pred_check_branch
        %823 = sbr.rel (%p821) target = $region102
      $region101: #{complex_nn_forward_t.1} parent=5 // pred_region
        %s824 = ssub.s32 %s18, 2
        // Predicated region
        $region103: #{complex_nn_forward_t.1} parent=101 // pred_check
          %p825 = pneg %p241
        $region104: #{complex_nn_forward_t.1} parent=101 // pred_check_branch
          %827 = sbr.rel (%p825) target = $region106
        $region105: #{complex_nn_forward_t.1} parent=101 // pred_region
          %s828 = sand.u32 %s226, 1
          %s829 = scalar_lea.sflag [#allocation4], %s828
          %s830 = sand.u32 %s226, 1
          %s831 = smul.addr %s830, 8
          %s832 = scalar_lea.vmem [#allocation3], %s831
          %834 = dma.done %s829, 128
        $region106: #{complex_nn_forward_t.1} parent=101 // pred_fallthru
          _
      $region102: #{complex_nn_forward_t.1} parent=5 // pred_fallthru
        _
    $region6: #{complex_nn_forward_t.1} parent=1 // loop_footer
      %s22 = sadd.s32 1, %s18
    $region7: #{complex_nn_forward_t.1} parent=1 // loop_footer_branch
      %17 = sbr.rel target = $region3
    $region8: #{complex_nn_forward_t.1} parent=1 // loop_exit
      _
    %835 = vsyncpa [#allocation4], 1
    %s836 = scalar_lea.sflag [#allocation4], 1
    %837 = vsyncpa %s836, 1

</llo_original>
